<compile_context>
chip_gen: v7x
topology: tpu7x:2x2x1
jax: 0.10.0
libtpu: 0.0.40
codegen_flags: <defaults>
</compile_context>

<pallas_src>
import functools

import jax
import jax.numpy as jnp
from jax.experimental import pallas as pl
from jax.experimental.pallas import tpu as pltpu

HIDDEN = 128


def _round_up(x, m):
    return ((x + m - 1) // m) * m


def _bf16_eup_ok():
    """bf16 VPU/EUP exists on v6e and newer; not on v2-v5."""
    try:
        kind = jax.devices()[0].device_kind.lower()
    except Exception:
        return False
    return not any(t in kind for t in ("v2", "v3", "v4", "v5"))


def _mlp_kernel(x_ref, w1_ref, b1_ref, w2_ref, b2_ref, w3_ref, b3_ref, o_ref,
                *, batch, block_b, mask_rows, tanh_dtype):
    """Fused 3-layer MLP: (x @ W1 + b1).tanh() @ W2 + b2 -> tanh -> @ W3 + b3.

    Dots run at the weights' dtype (bf16 on the MXU when enabled) with f32
    accumulation; bias adds stay f32; tanh runs in `tanh_dtype` (bf16 on
    v6e/v7x, f32 on v5e / strict-f32 path).
    """
    mm_dtype = w1_ref.dtype

    x = x_ref[...]
    if mask_rows:
        # Partial last tile: rows beyond the true batch hold garbage (Pallas
        # only masks the *writeback*), so zero them before any compute.
        row = pl.program_id(0) * block_b + jax.lax.broadcasted_iota(
            jnp.int32, x.shape, 0)
        x = jnp.where(row < batch, x, 0.0)
    x = x.astype(mm_dtype)

    h1 = jnp.dot(x, w1_ref[...], preferred_element_type=jnp.float32) + b1_ref[...]
    h1 = jnp.tanh(h1.astype(tanh_dtype)).astype(mm_dtype)

    h2 = jnp.dot(h1, w2_ref[...], preferred_element_type=jnp.float32) + b2_ref[...]
    h2 = jnp.tanh(h2.astype(tanh_dtype)).astype(mm_dtype)

    out = jnp.dot(h2, w3_ref[...], preferred_element_type=jnp.float32) + b3_ref[...]
    o_ref[...] = out.astype(o_ref.dtype)


@functools.partial(jax.jit, static_argnames=("block_b", "use_bf16", "bf16_tanh"))
def actor_critic_forward(state, params, block_b=512, use_bf16=True, bf16_tanh=None):
    """Runs actor_mean(state) with a fused Pallas kernel, tiled over batch."""
    if bf16_tanh is None:
        bf16_tanh = _bf16_eup_ok()

    w1, b1, w2, b2, w3, b3 = params
    B, state_dim = state.shape
    action_dim = w3.shape[1]

    # ---- batch tile --------------------------------------------------------
    # Clamp to the 8-rounded batch, then cap so the grid has >= 2 steps when
    # the batch allows it (v7x has 2 TensorCores; the batch grid axis is what
    # gets sharded across them -- a single step idles one core).
    bb = min(int(block_b), _round_up(B, 8))
    if B > 8:
        bb = min(bb, _round_up(pl.cdiv(B, 2), 8))
    bb = max(8, _round_up(bb, 8))

    grid = (pl.cdiv(B, bb),)
    mask_rows = (B % bb) != 0

    # ---- dtypes ------------------------------------------------------------
    mm_dtype = jnp.bfloat16 if use_bf16 else state.dtype
    tanh_dtype = jnp.bfloat16 if (use_bf16 and bf16_tanh) else jnp.float32
    w1c = w1.astype(mm_dtype)
    w2c = w2.astype(mm_dtype)
    w3c = w3.astype(mm_dtype)

    # Weights / biases: whole-array blocks, same block every grid step
    # (constant index_map -> resident in VMEM across the grid).
    # Note: pipeline_mode=pl.Buffered(1) on these would save ~150 KiB of VMEM
    # (they never change block index); omitted here for maximum portability.
    full = lambda shape: pl.BlockSpec(shape, lambda i: (0, 0))

    wbytes = 2 if use_bf16 else 4
    flops = 2 * B * (state_dim * HIDDEN + HIDDEN * HIDDEN + HIDDEN * action_dim)
    transcendentals = 2 * B * HIDDEN
    bytes_accessed = (
        B * state_dim * state.dtype.itemsize
        + (state_dim * HIDDEN + HIDDEN * HIDDEN + HIDDEN * action_dim) * wbytes
        + (2 * HIDDEN + action_dim) * 4
        + B * action_dim * state.dtype.itemsize
    )

    kernel = functools.partial(
        _mlp_kernel,
        batch=B,
        block_b=bb,
        mask_rows=mask_rows,
        tanh_dtype=tanh_dtype,
    )

    return pl.pallas_call(
        kernel,
        out_shape=jax.ShapeDtypeStruct((B, action_dim), state.dtype),
        grid_spec=pl.GridSpec(
            grid=grid,
            in_specs=[
                pl.BlockSpec((bb, state_dim), lambda i: (i, 0)),  # state tile
                full(w1c.shape), full(b1.shape),
                full(w2c.shape), full(b2.shape),
                full(w3c.shape), full(b3.shape),
            ],
            out_specs=pl.BlockSpec((bb, action_dim), lambda i: (i, 0)),
        ),
        compiler_params=pltpu.CompilerParams(
            dimension_semantics=("parallel",),
        ),
        cost_estimate=pl.CostEstimate(
            flops=flops,
            transcendentals=transcendentals,
            bytes_accessed=bytes_accessed,
        ),
    )(state, w1c, b1, w2c, b2, w3c, b3)


def init_params(key, state_dim, action_dim):
    """Deterministic synthetic params (shapes match nn.Linear layers, transposed)."""
    k1, k2, k3, k4, k5, k6 = jax.random.split(key, 6)

    def unif(k, shape, fan_in):
        bound = 1.0 / jnp.sqrt(fan_in)
        return jax.random.uniform(k, shape, jnp.float32, -bound, bound)

    w1 = unif(k1, (state_dim, HIDDEN), state_dim)
    b1 = unif(k2, (1, HIDDEN), state_dim)
    w2 = unif(k3, (HIDDEN, HIDDEN), HIDDEN)
    b2 = unif(k4, (1, HIDDEN), HIDDEN)
    w3 = unif(k5, (HIDDEN, action_dim), HIDDEN)
    b3 = unif(k6, (1, action_dim), HIDDEN)
    return (w1, b1, w2, b2, w3, b3)


def reference_forward(state, params):
    w1, b1, w2, b2, w3, b3 = params
    h1 = jnp.tanh(state @ w1 + b1)
    h2 = jnp.tanh(h1 @ w2 + b2)
    return h2 @ w3 + b3


if __name__ == "__main__":
    state_dim, action_dim = 8, 4

    key = jax.random.PRNGKey(0)
    k_params, k_state_a, k_state_b = jax.random.split(key, 3)
    params = init_params(k_params, state_dim, action_dim)

    # --- divisible batch (single tile) -------------------------------------
    state_a = jax.random.normal(k_state_a, (8, state_dim), jnp.float32)
    ref_a = reference_forward(state_a, params)
    out_a = jax.block_until_ready(actor_critic_forward(state_a, params))
    assert out_a.shape == (8, action_dim)
    assert jnp.allclose(out_a, ref_a, atol=2e-2, rtol=2e-2), "bf16 path mismatch (B=8)"

    # --- ragged batch (cdiv grid + in-kernel row mask + partial writeback) --
    state_b = jax.random.normal(k_state_b, (13, state_dim), jnp.float32)
    ref_b = reference_forward(state_b, params)
    out_b = jax.block_until_ready(actor_critic_forward(state_b, params))
    assert out_b.shape == (13, action_dim)
    assert jnp.allclose(out_b, ref_b, atol=2e-2, rtol=2e-2), "bf16 path mismatch (B=13)"

    # --- strict f32 path must match tightly ---------------------------------
    out_f32 = jax.block_until_ready(
        actor_critic_forward(state_b, params, use_bf16=False))
    assert out_f32.shape == (13, action_dim)
    assert jnp.allclose(out_f32, ref_b, atol=1e-5, rtol=1e-5), "f32 path mismatch"

    print("KERNEL_OK")
</pallas_src>

<mosaic_0001>
module attributes {stable_mosaic.version = 11 : i64} {
  func.func @_mlp_kernel(%arg0: i32, %arg1: memref<8x8xf32, #tpu.memory_space<vmem>>, %arg2: memref<8x128xbf16, #tpu.memory_space<vmem>>, %arg3: memref<1x128xf32, #tpu.memory_space<vmem>>, %arg4: memref<128x128xbf16, #tpu.memory_space<vmem>>, %arg5: memref<1x128xf32, #tpu.memory_space<vmem>>, %arg6: memref<128x4xbf16, #tpu.memory_space<vmem>>, %arg7: memref<1x4xf32, #tpu.memory_space<vmem>>, %arg8: memref<8x4xf32, #tpu.memory_space<vmem>>) attributes {dimension_semantics = [#tpu.dimension_semantics<parallel>], iteration_bounds = array<i64: 1>, scalar_prefetch = 0 : i64, scratch_operands = 0 : i64, tpu.core_type = #tpu.core_type<tc>, window_params = [{transform_indices = @transform_0, window_bounds = array<i64: 8, 8>}, {pipeline_mode = #tpu.pipeline_mode<synchronous>, transform_indices = @transform_1, window_bounds = array<i64: 8, 128>}, {pipeline_mode = #tpu.pipeline_mode<synchronous>, transform_indices = @transform_2, window_bounds = array<i64: 1, 128>}, {pipeline_mode = #tpu.pipeline_mode<synchronous>, transform_indices = @transform_3, window_bounds = array<i64: 128, 128>}, {pipeline_mode = #tpu.pipeline_mode<synchronous>, transform_indices = @transform_4, window_bounds = array<i64: 1, 128>}, {pipeline_mode = #tpu.pipeline_mode<synchronous>, transform_indices = @transform_5, window_bounds = array<i64: 128, 4>}, {pipeline_mode = #tpu.pipeline_mode<synchronous>, transform_indices = @transform_6, window_bounds = array<i64: 1, 4>}, {transform_indices = @transform_7, window_bounds = array<i64: 8, 4>}]} {
    %c0 = arith.constant 0 : index
    %c0_0 = arith.constant 0 : index
    %0 = vector.load %arg1[%c0, %c0_0] : memref<8x8xf32, #tpu.memory_space<vmem>>, vector<8x8xf32>
    %1 = arith.truncf %0 : vector<8x8xf32> to vector<8x8xbf16>
    %c0_1 = arith.constant 0 : index
    %c0_2 = arith.constant 0 : index
    %2 = vector.load %arg2[%c0_1, %c0_2] : memref<8x128xbf16, #tpu.memory_space<vmem>>, vector<8x128xbf16>
    %cst = arith.constant dense<0.000000e+00> : vector<8x128xf32>
    %3 = tpu.matmul %1, %2, %cst {dimension_numbers = #tpu.dot_dimension_numbers<[1], [0], [0], [1], [0, 0, 1, 1], [], []>} : vector<8x8xbf16>, vector<8x128xbf16>, vector<8x128xf32> -> vector<8x128xf32>
    %c0_3 = arith.constant 0 : index
    %c0_4 = arith.constant 0 : index
    %4 = vector.load %arg3[%c0_3, %c0_4] : memref<1x128xf32, #tpu.memory_space<vmem>>, vector<1x128xf32>
    %5 = vector.broadcast %4 : vector<1x128xf32> to vector<8x128xf32>
    %6 = arith.addf %3, %5 : vector<8x128xf32>
    %7 = arith.truncf %6 : vector<8x128xf32> to vector<8x128xbf16>
    %8 = math.tanh %7 : vector<8x128xbf16>
    %c0_5 = arith.constant 0 : index
    %c0_6 = arith.constant 0 : index
    %9 = vector.load %arg4[%c0_5, %c0_6] : memref<128x128xbf16, #tpu.memory_space<vmem>>, vector<128x128xbf16>
    %cst_7 = arith.constant dense<0.000000e+00> : vector<8x128xf32>
    %10 = tpu.matmul %8, %9, %cst_7 {dimension_numbers = #tpu.dot_dimension_numbers<[1], [0], [0], [1], [0, 0, 1, 1], [], []>} : vector<8x128xbf16>, vector<128x128xbf16>, vector<8x128xf32> -> vector<8x128xf32>
    %c0_8 = arith.constant 0 : index
    %c0_9 = arith.constant 0 : index
    %11 = vector.load %arg5[%c0_8, %c0_9] : memref<1x128xf32, #tpu.memory_space<vmem>>, vector<1x128xf32>
    %12 = vector.broadcast %11 : vector<1x128xf32> to vector<8x128xf32>
    %13 = arith.addf %10, %12 : vector<8x128xf32>
    %14 = arith.truncf %13 : vector<8x128xf32> to vector<8x128xbf16>
    %15 = math.tanh %14 : vector<8x128xbf16>
    %c0_10 = arith.constant 0 : index
    %c0_11 = arith.constant 0 : index
    %16 = vector.load %arg6[%c0_10, %c0_11] : memref<128x4xbf16, #tpu.memory_space<vmem>>, vector<128x4xbf16>
    %cst_12 = arith.constant dense<0.000000e+00> : vector<8x4xf32>
    %17 = tpu.matmul %15, %16, %cst_12 {dimension_numbers = #tpu.dot_dimension_numbers<[1], [0], [0], [1], [0, 0, 1, 1], [], []>} : vector<8x128xbf16>, vector<128x4xbf16>, vector<8x4xf32> -> vector<8x4xf32>
    %c0_13 = arith.constant 0 : index
    %c0_14 = arith.constant 0 : index
    %18 = vector.load %arg7[%c0_13, %c0_14] : memref<1x4xf32, #tpu.memory_space<vmem>>, vector<1x4xf32>
    %19 = vector.broadcast %18 : vector<1x4xf32> to vector<8x4xf32>
    %20 = arith.addf %17, %19 : vector<8x4xf32>
    %c0_15 = arith.constant 0 : index
    %c0_16 = arith.constant 0 : index
    %21 = vector.load %arg8[%c0_15, %c0_16] : memref<8x4xf32, #tpu.memory_space<vmem>>, vector<8x4xf32>
    tpu.vector_store %arg8[%c0_15, %c0_16], %20 {strides = array<i32>} : memref<8x4xf32, #tpu.memory_space<vmem>>, vector<8x4xf32>,
    return
  }
  func.func @transform_0(%arg0: i32) -> (i32, i32) {
    %c0_i32 = arith.constant 0 : i32
    %c0_i32_0 = arith.constant 0 : i32
    return %arg0, %c0_i32 : i32, i32
  }
  func.func @transform_1(%arg0: i32) -> (i32, i32) {
    %c0_i32 = arith.constant 0 : i32
    %c0_i32_0 = arith.constant 0 : i32
    %c0_i32_1 = arith.constant 0 : i32
    return %c0_i32, %c0_i32_0 : i32, i32
  }
  func.func @transform_2(%arg0: i32) -> (i32, i32) {
    %c0_i32 = arith.constant 0 : i32
    %c0_i32_0 = arith.constant 0 : i32
    %c0_i32_1 = arith.constant 0 : i32
    return %c0_i32, %c0_i32_0 : i32, i32
  }
  func.func @transform_3(%arg0: i32) -> (i32, i32) {
    %c0_i32 = arith.constant 0 : i32
    %c0_i32_0 = arith.constant 0 : i32
    %c0_i32_1 = arith.constant 0 : i32
    return %c0_i32, %c0_i32_0 : i32, i32
  }
  func.func @transform_4(%arg0: i32) -> (i32, i32) {
    %c0_i32 = arith.constant 0 : i32
    %c0_i32_0 = arith.constant 0 : i32
    %c0_i32_1 = arith.constant 0 : i32
    return %c0_i32, %c0_i32_0 : i32, i32
  }
  func.func @transform_5(%arg0: i32) -> (i32, i32) {
    %c0_i32 = arith.constant 0 : i32
    %c0_i32_0 = arith.constant 0 : i32
    %c0_i32_1 = arith.constant 0 : i32
    return %c0_i32, %c0_i32_0 : i32, i32
  }
  func.func @transform_6(%arg0: i32) -> (i32, i32) {
    %c0_i32 = arith.constant 0 : i32
    %c0_i32_0 = arith.constant 0 : i32
    %c0_i32_1 = arith.constant 0 : i32
    return %c0_i32, %c0_i32_0 : i32, i32
  }
  func.func @transform_7(%arg0: i32) -> (i32, i32) {
    %c0_i32 = arith.constant 0 : i32
    %c0_i32_0 = arith.constant 0 : i32
    return %arg0, %c0_i32 : i32, i32
  }
}

</mosaic_0001>

<llo_original>
// kernel: actor_critic_forward.1
$region0: #{actor_critic_forward.1}
  #allocation0 [shape = 'u32[]', space=smem, size = 0x4, offset = 0x4, fixed_abs, tag = 'smem constant byte address 0x4 - core index']
  #allocation1 [shape = 'u32[144,128]{1,0:T(1,128)}', space=vmem, size = 0x12000, scoped, tag = 'internal scratch']
  %s0 = inlined_call_operand.vmem [shape: f32[8,8], index: 0, kind: input, shape index: {}]
  %s1 = inlined_call_operand.vmem [shape: bf16[8,128], index: 1, kind: input, shape index: {}]
  %s2 = inlined_call_operand.vmem [shape: f32[1,128], index: 2, kind: input, shape index: {}]
  %s3 = inlined_call_operand.vmem [shape: bf16[128,128], index: 3, kind: input, shape index: {}]
  %s4 = inlined_call_operand.vmem [shape: f32[1,128], index: 4, kind: input, shape index: {}]
  %s5 = inlined_call_operand.vmem [shape: bf16[128,4], index: 5, kind: input, shape index: {}]
  %s6 = inlined_call_operand.vmem [shape: f32[1,4], index: 6, kind: input, shape index: {}]
  %s7 = inlined_call_operand.vmem [shape: f32[8,4], index: 7, kind: output, shape index: {}]
  %s8 = sld [smem:[#allocation0]]
  $region38: #{actor_critic_forward.1} parent=0
    _
  %s10 = ssub.s32 1, %s8
  %s11 = scalar_select 0, %s10, %s8
  // Predicated region
  $region2: #{actor_critic_forward.1} parent=0 // pred_check
    _
  $region3: #{actor_critic_forward.1} parent=0 // pred_check_branch
    %13 = sbr.rel (0) target = $region5
  $region4: #{actor_critic_forward.1} parent=0 // pred_region
    _
  $region5: #{actor_critic_forward.1} parent=0 // pred_fallthru
    _
  // Predicated region
  $region6: #{actor_critic_forward.1} parent=0 // pred_check
    _
  $region7: #{actor_critic_forward.1} parent=0 // pred_check_branch
    %15 = sbr.rel (0) target = $region9
  $region8: #{actor_critic_forward.1} parent=0 // pred_region
    _
  $region9: #{actor_critic_forward.1} parent=0 // pred_fallthru
    _
  // Predicated region
  $region10: #{actor_critic_forward.1} parent=0 // pred_check
    _
  $region11: #{actor_critic_forward.1} parent=0 // pred_check_branch
    %17 = sbr.rel (0) target = $region13
  $region12: #{actor_critic_forward.1} parent=0 // pred_region
    _
  $region13: #{actor_critic_forward.1} parent=0 // pred_fallthru
    _
  // Predicated region
  $region14: #{actor_critic_forward.1} parent=0 // pred_check
    _
  $region15: #{actor_critic_forward.1} parent=0 // pred_check_branch
    %19 = sbr.rel (0) target = $region17
  $region16: #{actor_critic_forward.1} parent=0 // pred_region
    _
  $region17: #{actor_critic_forward.1} parent=0 // pred_fallthru
    _
  // Predicated region
  $region18: #{actor_critic_forward.1} parent=0 // pred_check
    _
  $region19: #{actor_critic_forward.1} parent=0 // pred_check_branch
    %21 = sbr.rel (0) target = $region21
  $region20: #{actor_critic_forward.1} parent=0 // pred_region
    _
  $region21: #{actor_critic_forward.1} parent=0 // pred_fallthru
    _
  // Predicated region
  $region22: #{actor_critic_forward.1} parent=0 // pred_check
    _
  $region23: #{actor_critic_forward.1} parent=0 // pred_check_branch
    %23 = sbr.rel (0) target = $region25
  $region24: #{actor_critic_forward.1} parent=0 // pred_region
    _
  $region25: #{actor_critic_forward.1} parent=0 // pred_fallthru
    _
  // Predicated region
  $region26: #{actor_critic_forward.1} parent=0 // pred_check
    _
  $region27: #{actor_critic_forward.1} parent=0 // pred_check_branch
    %25 = sbr.rel (0) target = $region29
  $region28: #{actor_critic_forward.1} parent=0 // pred_region
    _
  $region29: #{actor_critic_forward.1} parent=0 // pred_fallthru
    _
  %v27 = vld [vmem:[%s0] sm:$0xff]
  %v28 = vpack.c.bf16 %v27, %v27
  %v29 = vld [vmem:[%s1] sm:$0xf]
  %v30 = vld [vmem:[%s2] sm:$0x1]
  %v32 = vlaneseq
  %v33 = vshrl.u32 %v32, 7
  %v34 = vsub.s32 0, %v33
  %v35 = vrot.slane %v30, %v34
  %vm37 = vcmask 64512
  %v39 = vsel %vm37, %v28, 0
  %vm41 = vcmask 1043456
  %v43 = vsel %vm41, %v29, 0
  %45 = vmatprep.subr.bf16.mxu0 0
  %46 = vmatpush1.bf16.msra.mxu0 %v43
  %47 = vmatprep.subr.bf16.mxu0 0
  %48 = vmatpush1.bf16.msra.mxu0 0
  %49 = vmatprep.subr.bf16.mxu0 0
  %50 = vmatpush1.bf16.msra.mxu0 0
  %51 = vmatprep.subr.bf16.mxu0 0
  %52 = vmatpush1.bf16.msra.mxu0 0
  %53 = vmatprep.subr.bf16.mxu0 0
  %54 = vmatpush1.bf16.msra.mxu0 0
  %55 = vmatprep.subr.bf16.mxu0 0
  %56 = vmatpush1.bf16.msra.mxu0 0
  %57 = vmatprep.subr.bf16.mxu0 0
  %58 = vmatpush1.bf16.msra.mxu0 0
  %59 = vmatprep.subr.bf16.mxu0 0
  %60 = vmatpush1.bf16.msra.mxu0 0
  %61 = vmatprep.subr.bf16.mxu0 0
  %62 = vmatpush1.bf16.msra.mxu0 0
  %63 = vmatprep.subr.bf16.mxu0 0
  %64 = vmatpush1.bf16.msra.mxu0 0
  %65 = vmatprep.subr.bf16.mxu0 0
  %66 = vmatpush1.bf16.msra.mxu0 0
  %67 = vmatprep.subr.bf16.mxu0 0
  %68 = vmatpush1.bf16.msra.mxu0 0
  %69 = vmatprep.subr.bf16.mxu0 0
  %70 = vmatpush1.bf16.msra.mxu0 0
  %71 = vmatprep.subr.bf16.mxu0 0
  %72 = vmatpush1.bf16.msra.mxu0 0
  %73 = vmatprep.subr.bf16.mxu0 0
  %74 = vmatpush1.bf16.msra.mxu0 0
  %75 = vmatprep.subr.bf16.mxu0 0
  %76 = vmatpush1.bf16.msra.mxu0 0
  %77 = vmatprep.mubr.bf16.mxu0 0
  %78 = vmatmul.mubr.bf16.gmra.mrb[0].mxu0 %v39
  %v79 = vpop.f32.mrb[0].mxu0
  %v80 = vadd.f32 %v35, %v79
  %v81 = vpop.f32.mrb[0].mxu0
  %v82 = vpop.f32.mrb[0].mxu0
  %v83 = vpop.f32.mrb[0].mxu0
  %84 = vdwg.mxu0
  %v85 = vpack.c.bf16 %v80, %v80
  %v86 = vtanh.bf16.pop %v85
  %v87 = vld [vmem:[%s3] sm:$0xf]
  %v88 = vld [vmem:[%s3 + $0x4] sm:$0xf]
  %v89 = vld [vmem:[%s3 + $0x8] sm:$0xf]
  %v90 = vld [vmem:[%s3 + $0xc] sm:$0xf]
  %v91 = vld [vmem:[%s3 + $0x10] sm:$0xf]
  %v92 = vld [vmem:[%s3 + $0x14] sm:$0xf]
  %v93 = vld [vmem:[%s3 + $0x18] sm:$0xf]
  %v94 = vld [vmem:[%s3 + $0x1c] sm:$0xf]
  %v95 = vld [vmem:[%s3 + $0x20] sm:$0xf]
  %v96 = vld [vmem:[%s3 + $0x24] sm:$0xf]
  %v97 = vld [vmem:[%s3 + $0x28] sm:$0xf]
  %v98 = vld [vmem:[%s3 + $0x2c] sm:$0xf]
  %v99 = vld [vmem:[%s3 + $0x30] sm:$0xf]
  %v100 = vld [vmem:[%s3 + $0x34] sm:$0xf]
  %v101 = vld [vmem:[%s3 + $0x38] sm:$0xf]
  %v102 = vld [vmem:[%s3 + $0x3c] sm:$0xf]
  %v103 = vld [vmem:[%s4] sm:$0x1]
  %v105 = vlaneseq
  %v106 = vshrl.u32 %v105, 7
  %v107 = vsub.s32 0, %v106
  %v108 = vrot.slane %v103, %v107
  %v126 = vunpack.c.l.b16 %v87
  %v127 = vunpack.c.l.b16 %v88
  %v128 = vunpack.c.l.b16 %v89
  %v129 = vunpack.c.l.b16 %v90
  %v130 = vunpack.c.l.b16 %v91
  %v131 = vunpack.c.l.b16 %v92
  %v132 = vunpack.c.l.b16 %v93
  %v133 = vunpack.c.l.b16 %v94
  %v134 = vunpack.c.l.b16 %v95
  %v135 = vunpack.c.l.b16 %v96
  %v136 = vunpack.c.l.b16 %v97
  %v137 = vunpack.c.l.b16 %v98
  %v138 = vunpack.c.l.b16 %v99
  %v139 = vunpack.c.l.b16 %v100
  %v140 = vunpack.c.l.b16 %v101
  %v141 = vunpack.c.l.b16 %v102
  %v142 = vpack.c.b16 %v127, %v126
  %v143 = vpack.c.b16 %v129, %v128
  %v144 = vpack.c.b16 %v131, %v130
  %v145 = vpack.c.b16 %v133, %v132
  %v146 = vpack.c.b16 %v135, %v134
  %v147 = vpack.c.b16 %v137, %v136
  %v148 = vpack.c.b16 %v139, %v138
  %v149 = vpack.c.b16 %v141, %v140
  %158 = vmatprep.subr.bf16.mxu0 0
  %159 = vmatpush1.bf16.msra.mxu0 %v142
  %160 = vmatprep.subr.bf16.mxu0 0
  %161 = vmatpush1.bf16.msra.mxu0 %v143
  %162 = vmatprep.subr.bf16.mxu0 0
  %163 = vmatpush1.bf16.msra.mxu0 %v144
  %164 = vmatprep.subr.bf16.mxu0 0
  %165 = vmatpush1.bf16.msra.mxu0 %v145
  %166 = vmatprep.subr.bf16.mxu0 0
  %167 = vmatpush1.bf16.msra.mxu0 %v146
  %168 = vmatprep.subr.bf16.mxu0 0
  %169 = vmatpush1.bf16.msra.mxu0 %v147
  %170 = vmatprep.subr.bf16.mxu0 0
  %171 = vmatpush1.bf16.msra.mxu0 %v148
  %172 = vmatprep.subr.bf16.mxu0 0
  %173 = vmatpush1.bf16.msra.mxu0 %v149
  %174 = vmatprep.subr.bf16.mxu0 0
  %175 = vmatpush1.bf16.msra.mxu0 0
  %176 = vmatprep.subr.bf16.mxu0 0
  %177 = vmatpush1.bf16.msra.mxu0 0
  %178 = vmatprep.subr.bf16.mxu0 0
  %179 = vmatpush1.bf16.msra.mxu0 0
  %180 = vmatprep.subr.bf16.mxu0 0
  %181 = vmatpush1.bf16.msra.mxu0 0
  %182 = vmatprep.subr.bf16.mxu0 0
  %183 = vmatpush1.bf16.msra.mxu0 0
  %184 = vmatprep.subr.bf16.mxu0 0
  %185 = vmatpush1.bf16.msra.mxu0 0
  %186 = vmatprep.subr.bf16.mxu0 0
  %187 = vmatpush1.bf16.msra.mxu0 0
  %188 = vmatprep.subr.bf16.mxu0 0
  %189 = vmatpush1.bf16.msra.mxu0 0
  %190 = vmatprep.mubr.bf16.mxu0 0
  %191 = vmatmul.mubr.bf16.gmra.mrb[0].mxu0 %v86
  %v192 = vpop.f32.mrb[0].mxu0
  %v193 = vadd.f32 %v108, %v192
  %v194 = vpop.f32.mrb[0].mxu0
  %v195 = vpop.f32.mrb[0].mxu0
  %v196 = vpop.f32.mrb[0].mxu0
  %197 = vdwg.mxu0
  %v198 = vpack.c.bf16 %v193, %v193
  %v199 = vtanh.bf16.pop %v198
  %v200 = vld [vmem:[%s5] sm:$0xf]
  %v201 = vld [vmem:[%s5 + $0x4] sm:$0xf]
  %v202 = vld [vmem:[%s5 + $0x8] sm:$0xf]
  %v203 = vld [vmem:[%s5 + $0xc] sm:$0xf]
  %v204 = vld [vmem:[%s5 + $0x10] sm:$0xf]
  %v205 = vld [vmem:[%s5 + $0x14] sm:$0xf]
  %v206 = vld [vmem:[%s5 + $0x18] sm:$0xf]
  %v207 = vld [vmem:[%s5 + $0x1c] sm:$0xf]
  %v208 = vld [vmem:[%s5 + $0x20] sm:$0xf]
  %v209 = vld [vmem:[%s5 + $0x24] sm:$0xf]
  %v210 = vld [vmem:[%s5 + $0x28] sm:$0xf]
  %v211 = vld [vmem:[%s5 + $0x2c] sm:$0xf]
  %v212 = vld [vmem:[%s5 + $0x30] sm:$0xf]
  %v213 = vld [vmem:[%s5 + $0x34] sm:$0xf]
  %v214 = vld [vmem:[%s5 + $0x38] sm:$0xf]
  %v215 = vld [vmem:[%s5 + $0x3c] sm:$0xf]
  %v216 = vld [vmem:[%s6] sm:$0x1]
  %v218 = vlaneseq
  %v219 = vshrl.u32 %v218, 7
  %v220 = vsub.s32 0, %v219
  %v221 = vrot.slane %v216, %v220
  %v239 = vunpack.c.l.b16 %v200
  %v240 = vunpack.c.l.b16 %v201
  %v241 = vunpack.c.l.b16 %v202
  %v242 = vunpack.c.l.b16 %v203
  %v243 = vunpack.c.l.b16 %v204
  %v244 = vunpack.c.l.b16 %v205
  %v245 = vunpack.c.l.b16 %v206
  %v246 = vunpack.c.l.b16 %v207
  %v247 = vunpack.c.l.b16 %v208
  %v248 = vunpack.c.l.b16 %v209
  %v249 = vunpack.c.l.b16 %v210
  %v250 = vunpack.c.l.b16 %v211
  %v251 = vunpack.c.l.b16 %v212
  %v252 = vunpack.c.l.b16 %v213
  %v253 = vunpack.c.l.b16 %v214
  %v254 = vunpack.c.l.b16 %v215
  %v255 = vpack.c.b16 %v240, %v239
  %v256 = vpack.c.b16 %v242, %v241
  %v257 = vpack.c.b16 %v244, %v243
  %v258 = vpack.c.b16 %v246, %v245
  %v259 = vpack.c.b16 %v248, %v247
  %v260 = vpack.c.b16 %v250, %v249
  %v261 = vpack.c.b16 %v252, %v251
  %v262 = vpack.c.b16 %v254, %v253
  %271 = vmatprep.subr.bf16.mxu0 0
  %272 = vmatpush1.bf16.msra.mxu0 %v255
  %273 = vmatprep.subr.bf16.mxu0 0
  %274 = vmatpush1.bf16.msra.mxu0 %v256
  %275 = vmatprep.subr.bf16.mxu0 0
  %276 = vmatpush1.bf16.msra.mxu0 %v257
  %277 = vmatprep.subr.bf16.mxu0 0
  %278 = vmatpush1.bf16.msra.mxu0 %v258
  %279 = vmatprep.subr.bf16.mxu0 0
  %280 = vmatpush1.bf16.msra.mxu0 %v259
  %281 = vmatprep.subr.bf16.mxu0 0
  %282 = vmatpush1.bf16.msra.mxu0 %v260
  %283 = vmatprep.subr.bf16.mxu0 0
  %284 = vmatpush1.bf16.msra.mxu0 %v261
  %285 = vmatprep.subr.bf16.mxu0 0
  %286 = vmatpush1.bf16.msra.mxu0 %v262
  %287 = vmatprep.subr.bf16.mxu0 0
  %288 = vmatpush1.bf16.msra.mxu0 0
  %289 = vmatprep.subr.bf16.mxu0 0
  %290 = vmatpush1.bf16.msra.mxu0 0
  %291 = vmatprep.subr.bf16.mxu0 0
  %292 = vmatpush1.bf16.msra.mxu0 0
  %293 = vmatprep.subr.bf16.mxu0 0
  %294 = vmatpush1.bf16.msra.mxu0 0
  %295 = vmatprep.subr.bf16.mxu0 0
  %296 = vmatpush1.bf16.msra.mxu0 0
  %297 = vmatprep.subr.bf16.mxu0 0
  %298 = vmatpush1.bf16.msra.mxu0 0
  %299 = vmatprep.subr.bf16.mxu0 0
  %300 = vmatpush1.bf16.msra.mxu0 0
  %301 = vmatprep.subr.bf16.mxu0 0
  %302 = vmatpush1.bf16.msra.mxu0 0
  %303 = vmatprep.mubr.bf16.mxu0 0
  %304 = vmatmul.mubr.bf16.gmra.mrb[0].mxu0 %v199
  %v305 = vpop.f32.mrb[0].mxu0
  %v306 = vadd.f32 %v221, %v305
  %v307 = vpop.f32.mrb[0].mxu0
  %v308 = vpop.f32.mrb[0].mxu0
  %v309 = vpop.f32.mrb[0].mxu0
  %310 = vdwg.mxu0
  %vm311 = vcmask 31744
  %312 = vst.msk [vmem:[%s7] sm:$0xff] %vm311, %v306
  // Predicated region
  $region30: #{actor_critic_forward.1} parent=0 // pred_check
    _
  $region31: #{actor_critic_forward.1} parent=0 // pred_check_branch
    %314 = sbr.rel (0) target = $region33
  $region32: #{actor_critic_forward.1} parent=0 // pred_region
    _
  $region33: #{actor_critic_forward.1} parent=0 // pred_fallthru
    _
  // Predicated region
  $region34: #{actor_critic_forward.1} parent=0 // pred_check
    _
  $region35: #{actor_critic_forward.1} parent=0 // pred_check_branch
    %316 = sbr.rel (0) target = $region37
  $region36: #{actor_critic_forward.1} parent=0 // pred_region
    _
  $region37: #{actor_critic_forward.1} parent=0 // pred_fallthru
    _

</llo_original>
